<compile_context>
chip_gen: v7x
topology: tpu7x:2x2x1
jax: 0.10.0
libtpu: 0.0.40
codegen_flags: <defaults>
</compile_context>

<pallas_src>
import functools

import jax
import jax.numpy as jnp
from jax.experimental import pallas as pl
from jax.experimental.pallas import tpu as pltpu


def ru(x, m):
    return (x + m - 1) // m * m


# ----------------------------------------------------------------------------
# Pallas kernels
# ----------------------------------------------------------------------------
def matmul_epilogue_kernel(*refs, relu, has_res):
    """out = x @ w + shift [+ residual] [ReLU].

    BN scale is pre-folded into `w`; `shift` carries conv-bias + BN shift.
    The ResNet block's residual add + ReLU is fused into the same epilogue.
    """
    if has_res:
        x_ref, w_ref, s_ref, r_ref, o_ref = refs
    else:
        x_ref, w_ref, s_ref, o_ref = refs
        r_ref = None
    acc = jnp.dot(x_ref[...], w_ref[...], preferred_element_type=jnp.float32)
    y = acc + s_ref[...]
    if has_res:
        y = y + r_ref[...].astype(jnp.float32)
    if relu:
        y = jnp.maximum(y, 0.0)
    o_ref[...] = y.astype(o_ref.dtype)


def maxpool_kernel(p_ref, o_ref):
    # p_ref: (bm, taps, C) — elementwise max over the tap axis (layout kept
    # as (M, taps, C); no HBM transpose in the wrapper).
    o_ref[...] = jnp.max(p_ref[...], axis=1)


def spatial_mean_kernel(x_ref, o_ref, *, inv_count):
    # x_ref: (N, HW, C) — mean over the spatial axis.
    o_ref[...] = jnp.sum(x_ref[...].astype(jnp.float32), axis=1) * inv_count


# ----------------------------------------------------------------------------
# Pallas wrappers
# ----------------------------------------------------------------------------
def matmul_fused(x, w, shift, *, relu, residual=None):
    """(M,K)@(K,N) + shift[1,N] (+ residual[M,N]) (+ReLU) on the MXU.

    Inputs are cast to bf16 (f32 accumulate).  tm is right-sized to M;
    N blocks are full-dim (no N padding); K is zero-padded to a multiple of
    128 so the contraction never touches layout padding.
    """
    M, K = x.shape
    Kw, N = w.shape
    assert K == Kw
    Mp = M if M % 8 == 0 else ru(M, 8)
    Kp = ru(K, 128)

    tm = min(128, Mp)
    tn = 128 if N % 128 == 0 else N
    # Keep >=2 tiles on a parallel axis when cheap, so v7x's two TensorCores
    # both get work instead of collapsing to a (1, 1) grid.
    if Mp == tm and N == tn and tm >= 16 and tm % 16 == 0:
        tm //= 2
    gm, gn = Mp // tm, N // tn

    xb = x.astype(jnp.bfloat16)
    wb = w.astype(jnp.bfloat16)
    if Mp != M or Kp != K:
        xb = jnp.pad(xb, ((0, Mp - M), (0, Kp - K)))
    if Kp != K:
        wb = jnp.pad(wb, ((0, Kp - K), (0, 0)))
    sb = shift.reshape(1, N).astype(jnp.float32)

    in_specs = [
        pl.BlockSpec((tm, Kp), lambda i, j: (i, 0)),
        pl.BlockSpec((Kp, tn), lambda i, j: (0, j)),
        pl.BlockSpec((1, tn), lambda i, j: (0, j)),
    ]
    args = [xb, wb, sb]
    if residual is not None:
        rb = residual.astype(jnp.float32)
        if Mp != M:
            rb = jnp.pad(rb, ((0, Mp - M), (0, 0)))
        in_specs.append(pl.BlockSpec((tm, tn), lambda i, j: (i, j)))
        args.append(rb)

    out = pl.pallas_call(
        functools.partial(matmul_epilogue_kernel, relu=relu,
                          has_res=residual is not None),
        out_shape=jax.ShapeDtypeStruct((Mp, N), jnp.float32),
        grid=(gm, gn),
        in_specs=in_specs,
        out_specs=pl.BlockSpec((tm, tn), lambda i, j: (i, j)),
        compiler_params=pltpu.CompilerParams(
            dimension_semantics=("parallel", "parallel")),
    )(*args)
    return out if Mp == M else out[:M]


def im2col(x, kh, kw, stride, pad, dilation=1, pad_value=0.0):
    """NHWC -> (N,Ho,Wo,kh*kw,C) patches (tap order (kh, kw)), with dilation."""
    N, H, W, C = x.shape
    xp = jnp.pad(x, ((0, 0), (pad, pad), (pad, pad), (0, 0)),
                 constant_values=pad_value)
    Ho = (H + 2 * pad - ((kh - 1) * dilation + 1)) // stride + 1
    Wo = (W + 2 * pad - ((kw - 1) * dilation + 1)) // stride + 1
    cols = []
    for i in range(kh):
        for j in range(kw):
            hi, wj = i * dilation, j * dilation
            cols.append(xp[:, hi:hi + stride * Ho:stride,
                           wj:wj + stride * Wo:stride, :])
    return jnp.stack(cols, axis=3), (N, Ho, Wo)


def conv_bn_act(x, p, *, stride=1, pad=0, dilation=1, relu=True, residual=None):
    """conv + bias + BatchNorm(eval) [+ residual] [+ ReLU] as one fused GEMM."""
    kh, kw, cin, cout = p["w"].shape
    xb = x.astype(jnp.bfloat16)             # patches materialize in bf16
    if kh == 1 and kw == 1 and stride == 1 and pad == 0:
        N, Ho, Wo = x.shape[0], x.shape[1], x.shape[2]
        pm = xb.reshape(N * Ho * Wo, cin)   # 1x1 conv: no im2col at all
    else:
        patches, (N, Ho, Wo) = im2col(xb, kh, kw, stride, pad, dilation)
        pm = patches.reshape(N * Ho * Wo, kh * kw * cin)
    scale = p["gamma"] * jax.lax.rsqrt(p["var"] + 1e-5)
    shift = p["beta"] + scale * (p["b"] - p["mean"])
    wm = p["w"].reshape(kh * kw * cin, cout) * scale[None, :]   # fold BN scale
    res = None if residual is None else residual.reshape(N * Ho * Wo, cout)
    out = matmul_fused(pm, wm, shift, relu=relu, residual=res)
    return out.reshape(N, Ho, Wo, cout)


def maxpool_3x3_s2(x):
    N, H, W, C = x.shape
    patches, (N, Ho, Wo) = im2col(x, 3, 3, 2, 1, pad_value=-jnp.inf)
    M = N * Ho * Wo
    p = patches.reshape(M, 9, C)
    if M <= 1024:
        Mp = M if M % 8 == 0 else ru(M, 8)
        bm = Mp
    else:
        Mp = ru(M, 512)
        bm = 512
    if Mp != M:
        p = jnp.pad(p, ((0, Mp - M), (0, 0), (0, 0)),
                    constant_values=-jnp.inf)
    out = pl.pallas_call(
        maxpool_kernel,
        out_shape=jax.ShapeDtypeStruct((Mp, C), jnp.float32),
        grid=(Mp // bm,),
        in_specs=[pl.BlockSpec((bm, 9, C), lambda i: (i, 0, 0))],
        out_specs=pl.BlockSpec((bm, C), lambda i: (i, 0)),
        compiler_params=pltpu.CompilerParams(
            dimension_semantics=("parallel",)),
    )(p)
    return out[:M].reshape(N, Ho, Wo, C)


def spatial_mean(x):
    """(N,H,W,C) -> (N,C) mean over H*W (single-block kernel; inputs are tiny)."""
    N, H, W, C = x.shape
    xr = x.reshape(N, H * W, C)
    return pl.pallas_call(
        functools.partial(spatial_mean_kernel, inv_count=1.0 / float(H * W)),
        out_shape=jax.ShapeDtypeStruct((N, C), jnp.float32),
    )(xr)


# ----------------------------------------------------------------------------
# ASPP + ResNet18 assembly
# ----------------------------------------------------------------------------
def aspp_fwd(x, p):
    """DeepLabV3-style ASPP: 1x1, dilated 3x3 (rates), image pooling; concat;
    1x1 projection.  Dropout is eval-mode identity."""
    N, H, W, C = x.shape
    ys = [conv_bn_act(x, p["b1x1"], relu=True)]
    for pb, r in zip(p["atrous"], p["rates"]):
        ys.append(conv_bn_act(x, pb, pad=r, dilation=r, relu=True))
    gp = spatial_mean(x).reshape(N, 1, 1, C)
    yp = conv_bn_act(gp, p["pool"], relu=True)            # (N,1,1,Cout)
    ys.append(jnp.broadcast_to(yp, (N, H, W, yp.shape[-1])))
    cat = jnp.concatenate(ys, axis=-1)
    return conv_bn_act(cat, p["proj"], relu=True)


def block_fwd(x, pb, stride):
    h = conv_bn_act(x, pb["conv1"], stride=stride, pad=1, relu=True)
    if pb["down"] is not None:
        # spec: identity_downsample = Conv2d(k=3, s=stride, p=1) + BN
        identity = conv_bn_act(x, pb["down"], stride=stride, pad=1, relu=False)
    else:
        identity = x
    # conv2 + BN + residual add + ReLU fused into a single GEMM epilogue.
    return conv_bn_act(h, pb["conv2"], stride=1, pad=1, relu=True,
                       residual=identity)


def resnet18_att_aspp_forward(params, x_nchw):
    x = jnp.transpose(x_nchw, (0, 2, 3, 1)).astype(jnp.float32)  # NCHW -> NHWC
    x = conv_bn_act(x, params["stem"], stride=2, pad=3, relu=True)
    x = maxpool_3x3_s2(x)
    x = aspp_fwd(x, params["aspp"])

    def run_layer(h, blocks, stride):
        h = block_fwd(h, blocks[0], stride)
        return block_fwd(h, blocks[1], 1)

    x1 = run_layer(x, params["layer1"], 1)
    x2 = run_layer(x1, params["layer2"], 2)
    x3 = run_layer(x2, params["layer3"], 2)
    x4 = run_layer(x3, params["layer4"], 2)

    pooled = spatial_mean(x4)                                   # (N, 512)
    logits = matmul_fused(pooled, params["fc_w"], params["fc_b"], relu=False)

    feats = [jnp.transpose(f, (0, 3, 1, 2)) for f in (x1, x2, x3, x4)]  # NCHW
    return logits, feats


# ----------------------------------------------------------------------------
# Deterministic parameter init (shapes from the PyTorch __init__)
# ----------------------------------------------------------------------------
def init_conv_bn(key, kh, kw, cin, cout, bias=True):
    k = jax.random.split(key, 6)
    return dict(
        w=0.05 * jax.random.normal(k[0], (kh, kw, cin, cout), jnp.float32),
        b=(0.05 * jax.random.normal(k[1], (cout,), jnp.float32)
           if bias else jnp.zeros((cout,), jnp.float32)),
        gamma=1.0 + 0.1 * jax.random.normal(k[2], (cout,), jnp.float32),
        beta=0.1 * jax.random.normal(k[3], (cout,), jnp.float32),
        mean=0.1 * jax.random.normal(k[4], (cout,), jnp.float32),
        var=1.0 + 0.1 * jnp.abs(jax.random.normal(k[5], (cout,), jnp.float32)),
    )


def init_params(key, in_channels, num_classes, aspp_rates=(2, 4, 8)):
    keys = iter(jax.random.split(key, 64))

    def make_block(cin, cout, down):
        return dict(
            conv1=init_conv_bn(next(keys), 3, 3, cin, cout),
            conv2=init_conv_bn(next(keys), 3, 3, cout, cout),
            down=init_conv_bn(next(keys), 3, 3, cin, cout) if down else None,
        )

    aspp = dict(
        rates=list(aspp_rates),
        b1x1=init_conv_bn(next(keys), 1, 1, 64, 64, bias=False),
        atrous=[init_conv_bn(next(keys), 3, 3, 64, 64, bias=False)
                for _ in aspp_rates],
        pool=init_conv_bn(next(keys), 1, 1, 64, 64, bias=False),
        proj=init_conv_bn(next(keys), 1, 1, 64 * (2 + len(aspp_rates)), 64,
                          bias=False),
    )

    return dict(
        stem=init_conv_bn(next(keys), 7, 7, in_channels, 64),
        aspp=aspp,
        layer1=[make_block(64, 64, False), make_block(64, 64, False)],
        layer2=[make_block(64, 128, True), make_block(128, 128, False)],
        layer3=[make_block(128, 256, True), make_block(256, 256, False)],
        layer4=[make_block(256, 512, True), make_block(512, 512, False)],
        fc_w=0.05 * jax.random.normal(next(keys), (512, num_classes),
                                      jnp.float32),
        fc_b=0.05 * jax.random.normal(next(keys), (num_classes,), jnp.float32),
    )


if __name__ == "__main__":
    key = jax.random.PRNGKey(0)
    kp, kx = jax.random.split(key)

    params = init_params(kp, in_channels=3, num_classes=10)
    x = jax.random.normal(kx, (2, 3, 32, 32), jnp.float32)  # NCHW, like PyTorch

    logits, feats = resnet18_att_aspp_forward(params, x)
    logits = jax.block_until_ready(logits)
    feats = [jax.block_until_ready(f) for f in feats]

    assert logits.shape == (2, 10)
    assert feats[0].shape == (2, 64, 8, 8)
    assert feats[1].shape == (2, 128, 4, 4)
    assert feats[2].shape == (2, 256, 2, 2)
    assert feats[3].shape == (2, 512, 1, 1)
    assert bool(jnp.all(jnp.isfinite(logits)))

    print("KERNEL_OK")
</pallas_src>

<mosaic_0001>
module attributes {stable_mosaic.version = 11 : i64} {
  func.func @matmul_epilogue_kernel(%arg0: i32, %arg1: i32, %arg2: memref<128x256xbf16, #tpu.memory_space<vmem>>, %arg3: memref<256x64xbf16, #tpu.memory_space<vmem>>, %arg4: memref<1x64xf32, #tpu.memory_space<vmem>>, %arg5: memref<128x64xf32, #tpu.memory_space<vmem>>) attributes {dimension_semantics = [#tpu.dimension_semantics<parallel>, #tpu.dimension_semantics<parallel>], iteration_bounds = array<i64: 4, 1>, scalar_prefetch = 0 : i64, scratch_operands = 0 : i64, tpu.core_type = #tpu.core_type<tc>, window_params = [{transform_indices = @transform_0, window_bounds = array<i64: 128, 256>}, {transform_indices = @transform_1, window_bounds = array<i64: 256, 64>}, {transform_indices = @transform_2, window_bounds = array<i64: 1, 64>}, {transform_indices = @transform_3, window_bounds = array<i64: 128, 64>}]} {
    %c0 = arith.constant 0 : index
    %c0_0 = arith.constant 0 : index
    %0 = vector.load %arg2[%c0, %c0_0] : memref<128x256xbf16, #tpu.memory_space<vmem>>, vector<128x256xbf16>
    %c0_1 = arith.constant 0 : index
    %c0_2 = arith.constant 0 : index
    %1 = vector.load %arg3[%c0_1, %c0_2] : memref<256x64xbf16, #tpu.memory_space<vmem>>, vector<256x64xbf16>
    %cst = arith.constant dense<0.000000e+00> : vector<128x64xf32>
    %2 = tpu.matmul %0, %1, %cst {dimension_numbers = #tpu.dot_dimension_numbers<[1], [0], [0], [1], [0, 0, 1, 1], [], []>} : vector<128x256xbf16>, vector<256x64xbf16>, vector<128x64xf32> -> vector<128x64xf32>
    %c0_3 = arith.constant 0 : index
    %c0_4 = arith.constant 0 : index
    %3 = vector.load %arg4[%c0_3, %c0_4] : memref<1x64xf32, #tpu.memory_space<vmem>>, vector<1x64xf32>
    %4 = vector.broadcast %3 : vector<1x64xf32> to vector<128x64xf32>
    %5 = arith.addf %2, %4 : vector<128x64xf32>
    %cst_5 = arith.constant 0.000000e+00 : f32
    %6 = vector.broadcast %cst_5 : f32 to vector<128x64xf32>
    %7 = arith.maximumf %5, %6 : vector<128x64xf32>
    %c0_6 = arith.constant 0 : index
    %c0_7 = arith.constant 0 : index
    %8 = vector.load %arg5[%c0_6, %c0_7] : memref<128x64xf32, #tpu.memory_space<vmem>>, vector<128x64xf32>
    tpu.vector_store %arg5[%c0_6, %c0_7], %7 {strides = array<i32>} : memref<128x64xf32, #tpu.memory_space<vmem>>, vector<128x64xf32>,
    return
  }
  func.func @transform_0(%arg0: i32, %arg1: i32) -> (i32, i32) {
    %c0_i32 = arith.constant 0 : i32
    %c0_i32_0 = arith.constant 0 : i32
    return %arg0, %c0_i32 : i32, i32
  }
  func.func @transform_1(%arg0: i32, %arg1: i32) -> (i32, i32) {
    %c0_i32 = arith.constant 0 : i32
    %c0_i32_0 = arith.constant 0 : i32
    return %c0_i32, %arg1 : i32, i32
  }
  func.func @transform_2(%arg0: i32, %arg1: i32) -> (i32, i32) {
    %c0_i32 = arith.constant 0 : i32
    %c0_i32_0 = arith.constant 0 : i32
    return %c0_i32, %arg1 : i32, i32
  }
  func.func @transform_3(%arg0: i32, %arg1: i32) -> (i32, i32) {
    %c0_i32 = arith.constant 0 : i32
    return %arg0, %arg1 : i32, i32
  }
}

</mosaic_0001>

<llo_original>
// kernel: tpu_custom_call.1
$region0: #{tpu_custom_call.1}
  #allocation0 [shape = 'u32[]', space=smem, size = 0x4, offset = 0x4, fixed_abs, tag = 'smem constant byte address 0x4 - core index']
  #allocation1 [shape = 'u32[144,128]{1,0:T(1,128)}', space=vmem, size = 0x12000, scoped, tag = 'internal scratch']
  %s0 = inlined_call_operand.hbm [shape: bf16[512,256], index: 0, kind: input, shape index: {}]
  %s1 = inlined_call_operand.vmem [shape: bf16[256,64], index: 1, kind: input, shape index: {}]
  %s2 = inlined_call_operand.vmem [shape: f32[1,64], index: 2, kind: input, shape index: {}]
  %s3 = inlined_call_operand.vmem [shape: f32[512,64], index: 3, kind: output, shape index: {}]
  %s4 = sld [smem:[#allocation0]]
  $region49: #{tpu_custom_call.1} parent=0
    _
  %s6 = ssub.s32 1, %s4
  %s7 = scalar_select 0, %s6, %s4
  $region1: #{tpu_custom_call.1} parent=0
    #allocation2 [shape = 'u8[131072]{0}', space=vmem, size = 0x20000, scoped, tag = 'input window, operand 0']
    #allocation3 [shape = 's32[2]{0}', space=sflag, size = 0x8, scoped, tag = 'scoped memory for tpu_custom_call.1']
    %8 = vsyncpa [#allocation3], 0
    %s9 = scalar_lea.sflag [#allocation3], 1
    %10 = vsyncpa %s9, 0
    loop: start=0, step=1, limit=6
    $region2: #{tpu_custom_call.1} parent=1 // loop_pre_header
      _
    $region3: #{tpu_custom_call.1} parent=1 // loop_header
      %s12 = sphi 0, %s16
      %p13 = scmp.ge.s32.totalorder %s12, 6
      %s19 = sphi 0, %s31
      %s20 = sphi 0, %s27
      %s21 = sphi 0, %s19
      %s22 = sphi 0, %s20
      %s23 = sphi 0, %s21
      %s24 = sphi 0, %s22
      %s34 = sphi 0, %s36
      %s37 = sphi 0, %s34
      %s38 = sphi 0, %s37
      %s54 = sphi 0, %s38
      %s60 = sphi 0, %s62
      %s63 = sphi 0, %s60
      %s64 = sphi 0, %s63
      %s80 = sphi 0, %s64
      %s86 = sphi 0, %s88
      %s89 = sphi 0, %s86
      %s90 = sphi 0, %s89
      %s106 = sphi 0, %s90
      %s114 = sphi 0, %s116
      %s117 = sphi 0, %s114
      %s118 = sphi 0, %s117
      %s134 = sphi 0, %s118
    $region4: #{tpu_custom_call.1} parent=1 // loop_header_branch
      %15 = sbr.rel (%p13) target = $region8
    $region5: #{tpu_custom_call.1} parent=1 // loop_body
      %s17 = ssub.s32 %s12, 1
      %s18 = ssub.s32 %s12, 2
      %s25 = sadd.s32 1, %s20
      %p26 = scmp.ge.s32.totalorder %s25, 1
      %s27 = scalar_select %p26, 0, %s25
      %s28 = sadd.s32 1, %s19
      %s29 = scalar_select %p26, %s28, %s19
      %p30 = scmp.ge.s32.totalorder %s29, 4
      %s31 = scalar_select %p30, 0, %s29
      %s32 = ssub.s32 %s19, %s31
      %p33 = scmp.eq.s32.totalorder %s32, 0
      %s35 = sadd.s32 %s34, 1
      %s36 = scalar_select %p33, %s34, %s35
      %p39 = pneg %p33
      %p40 = scmp.eq.s32.totalorder %s12, 3
      %p41 = por %p39, %p40
      %p42 = scmp.ne.s32.totalorder %s34, %s37
      %p43 = scmp.eq.s32.totalorder %s12, 0
      %p44 = por %p42, %p43
      %p45 = scmp.ne.s32.totalorder %s34, %s37
      %p46 = scmp.eq.s32.totalorder %s17, 3
      %p47 = por %p45, %p46
      %p48 = scmp.ne.s32.totalorder %s37, %s38
      %p49 = scmp.eq.s32.totalorder %s17, 0
      %p50 = por %p48, %p49
      %p51 = scmp.ne.s32.totalorder %s37, %s38
      %p52 = scmp.eq.s32.totalorder %s18, 3
      %p53 = por %p51, %p52
      %p55 = scmp.ne.s32.totalorder %s38, %s54
      %p56 = scmp.eq.s32.totalorder %s18, 0
      %p57 = por %p55, %p56
      %s58 = ssub.s32 %s20, %s27
      %p59 = scmp.eq.s32.totalorder %s58, 0
      %s61 = sadd.s32 %s60, 1
      %s62 = scalar_select %p59, %s60, %s61
      %p65 = pneg %p59
      %p66 = scmp.eq.s32.totalorder %s12, 3
      %p67 = por %p65, %p66
      %p68 = scmp.ne.s32.totalorder %s60, %s63
      %p69 = scmp.eq.s32.totalorder %s12, 0
      %p70 = por %p68, %p69
      %p71 = scmp.ne.s32.totalorder %s60, %s63
      %p72 = scmp.eq.s32.totalorder %s17, 3
      %p73 = por %p71, %p72
      %p74 = scmp.ne.s32.totalorder %s63, %s64
      %p75 = scmp.eq.s32.totalorder %s17, 0
      %p76 = por %p74, %p75
      %p77 = scmp.ne.s32.totalorder %s63, %s64
      %p78 = scmp.eq.s32.totalorder %s18, 3
      %p79 = por %p77, %p78
      %p81 = scmp.ne.s32.totalorder %s64, %s80
      %p82 = scmp.eq.s32.totalorder %s18, 0
      %p83 = por %p81, %p82
      %s84 = ssub.s32 %s20, %s27
      %p85 = scmp.eq.s32.totalorder %s84, 0
      %s87 = sadd.s32 %s86, 1
      %s88 = scalar_select %p85, %s86, %s87
      %p91 = pneg %p85
      %p92 = scmp.eq.s32.totalorder %s12, 3
      %p93 = por %p91, %p92
      %p94 = scmp.ne.s32.totalorder %s86, %s89
      %p95 = scmp.eq.s32.totalorder %s12, 0
      %p96 = por %p94, %p95
      %p97 = scmp.ne.s32.totalorder %s86, %s89
      %p98 = scmp.eq.s32.totalorder %s17, 3
      %p99 = por %p97, %p98
      %p100 = scmp.ne.s32.totalorder %s89, %s90
      %p101 = scmp.eq.s32.totalorder %s17, 0
      %p102 = por %p100, %p101
      %p103 = scmp.ne.s32.totalorder %s89, %s90
      %p104 = scmp.eq.s32.totalorder %s18, 3
      %p105 = por %p103, %p104
      %p107 = scmp.ne.s32.totalorder %s90, %s106
      %p108 = scmp.eq.s32.totalorder %s18, 0
      %p109 = por %p107, %p108
      %s110 = ssub.s32 %s19, %s31
      %s111 = ssub.s32 %s20, %s27
      %s112 = sor.u32 %s110, %s111
      %p113 = scmp.eq.s32.totalorder %s112, 0
      %s115 = sadd.s32 %s114, 1
      %s116 = scalar_select %p113, %s114, %s115
      %p119 = pneg %p113
      %p120 = scmp.eq.s32.totalorder %s12, 3
      %p121 = por %p119, %p120
      %p122 = scmp.ne.s32.totalorder %s114, %s117
      %p123 = scmp.eq.s32.totalorder %s12, 0
      %p124 = por %p122, %p123
      %p125 = scmp.ne.s32.totalorder %s114, %s117
      %p126 = scmp.eq.s32.totalorder %s17, 3
      %p127 = por %p125, %p126
      %p128 = scmp.ne.s32.totalorder %s117, %s118
      %p129 = scmp.eq.s32.totalorder %s17, 0
      %p130 = por %p128, %p129
      %p131 = scmp.ne.s32.totalorder %s117, %s118
      %p132 = scmp.eq.s32.totalorder %s18, 3
      %p133 = por %p131, %p132
      %p135 = scmp.ne.s32.totalorder %s118, %s134
      %p136 = scmp.eq.s32.totalorder %s18, 0
      %p137 = por %p135, %p136
      %p138 = scmp.le.s32.totalorder 1, %s12
      %p139 = scmp.lt.s32.totalorder %s12, 5
      %p140 = pnand %p138, %p139
      %p141 = pneg %p140
      // Predicated region
      $region9: #{tpu_custom_call.1} parent=5 // pred_check
        _
      $region10: #{tpu_custom_call.1} parent=5 // pred_check_branch
        %143 = sbr.rel (%p140) target = $region12
      $region11: #{tpu_custom_call.1} parent=5 // pred_region
        %s144 = ssub.s32 %s12, 1
        // Predicated region
        $region13: #{tpu_custom_call.1} parent=11 // pred_check
          %p145 = pneg %p76
        $region14: #{tpu_custom_call.1} parent=11 // pred_check_branch
          %147 = sbr.rel (%p145) target = $region16
        $region15: #{tpu_custom_call.1} parent=11 // pred_region
          %p148 = scmp.lt.s32.totalorder %s22, 0
          %s149 = scalar_select %p148, %s22, 0
          %s150 = smul.addr %s149, 4
          %s151 = scalar_lea.vmem %s1, %s150
        $region16: #{tpu_custom_call.1} parent=11 // pred_fallthru
          _
        // Predicated region
        $region17: #{tpu_custom_call.1} parent=11 // pred_check
          %p152 = pneg %p102
        $region18: #{tpu_custom_call.1} parent=11 // pred_check_branch
          %154 = sbr.rel (%p152) target = $region20
        $region19: #{tpu_custom_call.1} parent=11 // pred_region
          %p155 = scmp.lt.s32.totalorder %s22, 0
          %s156 = scalar_select %p155, %s22, 0
          %s157 = scalar_lea.vmem %s2, %s156
        $region20: #{tpu_custom_call.1} parent=11 // pred_fallthru
          _
      $region12: #{tpu_custom_call.1} parent=5 // pred_fallthru
        _
      %p158 = scmp.lt.s32.totalorder %s12, 4
      // Predicated region
      $region21: #{tpu_custom_call.1} parent=5 // pred_check
        %p159 = pneg %p158
      $region22: #{tpu_custom_call.1} parent=5 // pred_check_branch
        %161 = sbr.rel (%p159) target = $region24
      $region23: #{tpu_custom_call.1} parent=5 // pred_region
        // Predicated region
        $region25: #{tpu_custom_call.1} parent=23 // pred_check
          %p162 = pneg %p44
        $region26: #{tpu_custom_call.1} parent=23 // pred_check_branch
          %164 = sbr.rel (%p162) target = $region28
        $region27: #{tpu_custom_call.1} parent=23 // pred_region
          %s165 = sand.u32 %s34, 1
          %s166 = scalar_lea.sflag [#allocation3], %s165
          %s167 = sand.u32 %s34, 1
          %s168 = smul.addr %s167, 128
          %s169 = scalar_lea.vmem [#allocation2], %s168
          %s170 = smul.u32 16, %s19
          %s172 = ssub.s32 2048, 2048
          %173 = vsyncadd %s166, %s172
          %s174 = smul.addr %s170, 2
          %s175 = smul.addr %s174, 64
          %s176 = scalar_lea.hbm %s0, %s175
          %s177 = sshll.u32 %s169, 4
          %s178 = int_to_ptr.vmem [resolvable:$true] %s177
          %183 = dma.hbm_to_vmem [thread:$0]  %s176, 2048, %s178, %s166, 128, 128, 8
        $region28: #{tpu_custom_call.1} parent=23 // pred_fallthru
          _
      $region24: #{tpu_custom_call.1} parent=5 // pred_fallthru
        _
      %p184 = scmp.le.s32.totalorder 1, %s12
      %p185 = scmp.lt.s32.totalorder %s12, 5
      %p186 = pnand %p184, %p185
      %p187 = pneg %p186
      // Predicated region
      $region29: #{tpu_custom_call.1} parent=5 // pred_check
        _
      $region30: #{tpu_custom_call.1} parent=5 // pred_check_branch
        %189 = sbr.rel (%p186) target = $region32
      $region31: #{tpu_custom_call.1} parent=5 // pred_region
        %s190 = ssub.s32 %s12, 1
        %s191 = sand.u32 %s37, 1
        %s192 = scalar_lea.sflag [#allocation3], %s191
        %s193 = sand.u32 %s37, 1
        %s194 = smul.addr %s193, 128
        %s195 = scalar_lea.vmem [#allocation2], %s194
        // Predicated region
        $region33: #{tpu_custom_call.1} parent=31 // pred_check
          %p196 = pneg %p50
        $region34: #{tpu_custom_call.1} parent=31 // pred_check_branch
          %198 = sbr.rel (%p196) target = $region36
        $region35: #{tpu_custom_call.1} parent=31 // pred_region
          %199 = dma.done %s192, 2048
        $region36: #{tpu_custom_call.1} parent=31 // pred_fallthru
          _
        %s200 = sand.u32 %s37, 1
        %s201 = scalar_lea.sflag [#allocation3], %s200
        %s202 = sand.u32 %s37, 1
        %s203 = smul.addr %s202, 128
        %s204 = scalar_lea.vmem [#allocation2], %s203
        %p205 = pneg %p50
        %p206 = pneg %p47
        %p207 = scmp.lt.s32.totalorder %s22, 0
        %s208 = scalar_select %p207, %s22, 0
        %s209 = smul.addr %s208, 4
        %s210 = scalar_lea.vmem %s1, %s209
        %p211 = pneg %p76
        %p212 = pneg %p73
        %p213 = scmp.lt.s32.totalorder %s22, 0
        %s214 = scalar_select %p213, %s22, 0
        %s215 = scalar_lea.vmem %s2, %s214
        %p216 = pneg %p102
        %p217 = pneg %p99
        %p218 = pneg %p130
        %p219 = pneg %p127
        %s220 = smul.u32 16, %s21
        %p221 = scmp.lt.s32.totalorder %s220, 63
        %s222 = scalar_select %p221, %s220, 63
        %p223 = scmp.lt.s32.totalorder %s22, 0
        %s224 = scalar_select %p223, %s22, 0
        %s225 = sadd.s32 %s224, %s222
        %s226 = smul.addr %s225, 8
        %s227 = scalar_lea.vmem %s3, %s226
        %s228 = smul.u32 16, %s21
        %p229 = scmp.lt.s32.totalorder %s22, 0
        %s230 = scalar_select %p229, %s22, 0
        %s231 = smul.addr %s230, 4
        %s232 = scalar_lea.vmem %s1, %s231
        %p233 = scmp.lt.s32.totalorder %s22, 0
        %s234 = scalar_select %p233, %s22, 0
        %s235 = scalar_lea.vmem %s2, %s234
        %s236 = smul.u32 16, %s21
        %p237 = scmp.lt.s32.totalorder %s236, 63
        %s238 = scalar_select %p237, %s236, 63
        %p239 = scmp.lt.s32.totalorder %s22, 0
        %s240 = scalar_select %p239, %s22, 0
        %s241 = sadd.s32 %s240, %s238
        %s242 = smul.addr %s241, 8
        %s243 = scalar_lea.vmem %s3, %s242
        %s244 = smul.u32 16, %s21
        %v246 = vld [vmem:[%s195] sm:$0xff]
        %v247 = vld [vmem:[%s195 + $0x8] sm:$0xff]
        %v248 = vld [vmem:[%s195 + $0x10] sm:$0xff]
        %v249 = vld [vmem:[%s195 + $0x18] sm:$0xff]
        %v250 = vld [vmem:[%s195 + $0x20] sm:$0xff]
        %v251 = vld [vmem:[%s195 + $0x28] sm:$0xff]
        %v252 = vld [vmem:[%s195 + $0x30] sm:$0xff]
        %v253 = vld [vmem:[%s195 + $0x38] sm:$0xff]
        %v254 = vld [vmem:[%s195 + $0x40] sm:$0xff]
        %v255 = vld [vmem:[%s195 + $0x48] sm:$0xff]
        %v256 = vld [vmem:[%s195 + $0x50] sm:$0xff]
        %v257 = vld [vmem:[%s195 + $0x58] sm:$0xff]
        %v258 = vld [vmem:[%s195 + $0x60] sm:$0xff]
        %v259 = vld [vmem:[%s195 + $0x68] sm:$0xff]
        %v260 = vld [vmem:[%s195 + $0x70] sm:$0xff]
        %v261 = vld [vmem:[%s195 + $0x78] sm:$0xff]
        %v262 = vld [vmem:[%s232] sm:$0xf]
        %v263 = vld [vmem:[%s232 + $0x4] sm:$0xf]
        %v264 = vld [vmem:[%s232 + $0x8] sm:$0xf]
        %v265 = vld [vmem:[%s232 + $0xc] sm:$0xf]
        %v266 = vld [vmem:[%s232 + $0x10] sm:$0xf]
        %v267 = vld [vmem:[%s232 + $0x14] sm:$0xf]
        %v268 = vld [vmem:[%s232 + $0x18] sm:$0xf]
        %v269 = vld [vmem:[%s232 + $0x1c] sm:$0xf]
        %v270 = vld [vmem:[%s232 + $0x20] sm:$0xf]
        %v271 = vld [vmem:[%s232 + $0x24] sm:$0xf]
        %v272 = vld [vmem:[%s232 + $0x28] sm:$0xf]
        %v273 = vld [vmem:[%s232 + $0x2c] sm:$0xf]
        %v274 = vld [vmem:[%s232 + $0x30] sm:$0xf]
        %v275 = vld [vmem:[%s232 + $0x34] sm:$0xf]
        %v276 = vld [vmem:[%s232 + $0x38] sm:$0xf]
        %v277 = vld [vmem:[%s232 + $0x3c] sm:$0xf]
        %v278 = vld [vmem:[%s232 + $0x40] sm:$0xf]
        %v279 = vld [vmem:[%s232 + $0x44] sm:$0xf]
        %v280 = vld [vmem:[%s232 + $0x48] sm:$0xf]
        %v281 = vld [vmem:[%s232 + $0x4c] sm:$0xf]
        %v282 = vld [vmem:[%s232 + $0x50] sm:$0xf]
        %v283 = vld [vmem:[%s232 + $0x54] sm:$0xf]
        %v284 = vld [vmem:[%s232 + $0x58] sm:$0xf]
        %v285 = vld [vmem:[%s232 + $0x5c] sm:$0xf]
        %v286 = vld [vmem:[%s232 + $0x60] sm:$0xf]
        %v287 = vld [vmem:[%s232 + $0x64] sm:$0xf]
        %v288 = vld [vmem:[%s232 + $0x68] sm:$0xf]
        %v289 = vld [vmem:[%s232 + $0x6c] sm:$0xf]
        %v290 = vld [vmem:[%s232 + $0x70] sm:$0xf]
        %v291 = vld [vmem:[%s232 + $0x74] sm:$0xf]
        %v292 = vld [vmem:[%s232 + $0x78] sm:$0xf]
        %v293 = vld [vmem:[%s232 + $0x7c] sm:$0xf]
        %v294 = vld [vmem:[%s235] sm:$0x1]
        %v296 = vlaneseq
        %v297 = vshrl.u32 %v296, 7
        %v298 = vsub.s32 0, %v297
        %v299 = vrot.slane %v294, %v298
        %v317 = vunpack.c.l.b16 %v246
        %v318 = vunpack.c.h.b16 %v246
        %v319 = vunpack.c.l.b16 %v247
        %v320 = vunpack.c.h.b16 %v247
        %v321 = vunpack.c.l.b16 %v248
        %v322 = vunpack.c.h.b16 %v248
        %v323 = vunpack.c.l.b16 %v249
        %v324 = vunpack.c.h.b16 %v249
        %v325 = vunpack.c.l.b16 %v250
        %v326 = vunpack.c.h.b16 %v250
        %v327 = vunpack.c.l.b16 %v251
        %v328 = vunpack.c.h.b16 %v251
        %v329 = vunpack.c.l.b16 %v252
        %v330 = vunpack.c.h.b16 %v252
        %v331 = vunpack.c.l.b16 %v253
        %v332 = vunpack.c.h.b16 %v253
        %v333 = vunpack.c.l.b16 %v254
        %v334 = vunpack.c.h.b16 %v254
        %v335 = vunpack.c.l.b16 %v255
        %v336 = vunpack.c.h.b16 %v255
        %v337 = vunpack.c.l.b16 %v256
        %v338 = vunpack.c.h.b16 %v256
        %v339 = vunpack.c.l.b16 %v257
        %v340 = vunpack.c.h.b16 %v257
        %v341 = vunpack.c.l.b16 %v258
        %v342 = vunpack.c.h.b16 %v258
        %v343 = vunpack.c.l.b16 %v259
        %v344 = vunpack.c.h.b16 %v259
        %v345 = vunpack.c.l.b16 %v260
        %v346 = vunpack.c.h.b16 %v260
        %v347 = vunpack.c.l.b16 %v261
        %v348 = vunpack.c.h.b16 %v261
        %v349 = vpack.c.b16 %v319, %v317
        %v350 = vpack.c.b16 %v320, %v318
        %v351 = vpack.c.b16 %v323, %v321
        %v352 = vpack.c.b16 %v324, %v322
        %v353 = vpack.c.b16 %v327, %v325
        %v354 = vpack.c.b16 %v328, %v326
        %v355 = vpack.c.b16 %v331, %v329
        %v356 = vpack.c.b16 %v332, %v330
        %v357 = vpack.c.b16 %v335, %v333
        %v358 = vpack.c.b16 %v336, %v334
        %v359 = vpack.c.b16 %v339, %v337
        %v360 = vpack.c.b16 %v340, %v338
        %v361 = vpack.c.b16 %v343, %v341
        %v362 = vpack.c.b16 %v344, %v342
        %v363 = vpack.c.b16 %v347, %v345
        %v364 = vpack.c.b16 %v348, %v346
        %v413 = vunpack.c.l.b16 %v262
        %v414 = vunpack.c.l.b16 %v263
        %v415 = vunpack.c.l.b16 %v264
        %v416 = vunpack.c.l.b16 %v265
        %v417 = vunpack.c.l.b16 %v266
        %v418 = vunpack.c.l.b16 %v267
        %v419 = vunpack.c.l.b16 %v268
        %v420 = vunpack.c.l.b16 %v269
        %v421 = vunpack.c.l.b16 %v270
        %v422 = vunpack.c.l.b16 %v271
        %v423 = vunpack.c.l.b16 %v272
        %v424 = vunpack.c.l.b16 %v273
        %v425 = vunpack.c.l.b16 %v274
        %v426 = vunpack.c.l.b16 %v275
        %v427 = vunpack.c.l.b16 %v276
        %v428 = vunpack.c.l.b16 %v277
        %v429 = vunpack.c.l.b16 %v278
        %v430 = vunpack.c.l.b16 %v279
        %v431 = vunpack.c.l.b16 %v280
        %v432 = vunpack.c.l.b16 %v281
        %v433 = vunpack.c.l.b16 %v282
        %v434 = vunpack.c.l.b16 %v283
        %v435 = vunpack.c.l.b16 %v284
        %v436 = vunpack.c.l.b16 %v285
        %v437 = vunpack.c.l.b16 %v286
        %v438 = vunpack.c.l.b16 %v287
        %v439 = vunpack.c.l.b16 %v288
        %v440 = vunpack.c.l.b16 %v289
        %v441 = vunpack.c.l.b16 %v290
        %v442 = vunpack.c.l.b16 %v291
        %v443 = vunpack.c.l.b16 %v292
        %v444 = vunpack.c.l.b16 %v293
        %v445 = vpack.c.b16 %v414, %v413
        %v446 = vpack.c.b16 %v416, %v415
        %v447 = vpack.c.b16 %v418, %v417
        %v448 = vpack.c.b16 %v420, %v419
        %v449 = vpack.c.b16 %v422, %v421
        %v450 = vpack.c.b16 %v424, %v423
        %v451 = vpack.c.b16 %v426, %v425
        %v452 = vpack.c.b16 %v428, %v427
        %v453 = vpack.c.b16 %v430, %v429
        %v454 = vpack.c.b16 %v432, %v431
        %v455 = vpack.c.b16 %v434, %v433
        %v456 = vpack.c.b16 %v436, %v435
        %v457 = vpack.c.b16 %v438, %v437
        %v458 = vpack.c.b16 %v440, %v439
        %v459 = vpack.c.b16 %v442, %v441
        %v460 = vpack.c.b16 %v444, %v443
        %477 = vmatprep.subr.bf16.mxu0 0
        %478 = vmatpush1.bf16.msra.mxu0 %v445
        %479 = vmatprep.subr.bf16.mxu0 0
        %480 = vmatpush1.bf16.msra.mxu0 %v446
        %481 = vmatprep.subr.bf16.mxu0 0
        %482 = vmatpush1.bf16.msra.mxu0 %v447
        %483 = vmatprep.subr.bf16.mxu0 0
        %484 = vmatpush1.bf16.msra.mxu0 %v448
        %485 = vmatprep.subr.bf16.mxu0 0
        %486 = vmatpush1.bf16.msra.mxu0 %v449
        %487 = vmatprep.subr.bf16.mxu0 0
        %488 = vmatpush1.bf16.msra.mxu0 %v450
        %489 = vmatprep.subr.bf16.mxu0 0
        %490 = vmatpush1.bf16.msra.mxu0 %v451
        %491 = vmatprep.subr.bf16.mxu0 0
        %492 = vmatpush1.bf16.msra.mxu0 %v452
        %493 = vmatprep.subr.bf16.mxu0 0
        %494 = vmatpush1.bf16.msra.mxu0 %v453
        %495 = vmatprep.subr.bf16.mxu0 0
        %496 = vmatpush1.bf16.msra.mxu0 %v454
        %497 = vmatprep.subr.bf16.mxu0 0
        %498 = vmatpush1.bf16.msra.mxu0 %v455
        %499 = vmatprep.subr.bf16.mxu0 0
        %500 = vmatpush1.bf16.msra.mxu0 %v456
        %501 = vmatprep.subr.bf16.mxu0 0
        %502 = vmatpush1.bf16.msra.mxu0 %v457
        %503 = vmatprep.subr.bf16.mxu0 0
        %504 = vmatpush1.bf16.msra.mxu0 %v458
        %505 = vmatprep.subr.bf16.mxu0 0
        %506 = vmatpush1.bf16.msra.mxu0 %v459
        %507 = vmatprep.subr.bf16.mxu0 0
        %508 = vmatpush1.bf16.msra.mxu0 %v460
        %509 = vmatprep.mubr.bf16.mxu0 %v350
        %510 = vmatmul.mubr.bf16.gmra.mrb[0].mxu0 %v349
        %v511 = vpop.f32.mrb[0].mxu0
        %v512 = vadd.f32 %v299, %v511
        %v513 = vpop.f32.mrb[0].mxu0
        %v514 = vpop.f32.mrb[0].mxu0
        %v515 = vadd.f32 %v299, %v514
        %v516 = vpop.f32.mrb[0].mxu0
        %517 = vmatprep.mubr.bf16.mxu0 %v352
        %518 = vmatmul.mubr.bf16.gmra.mrb[0].mxu0 %v351
        %v519 = vpop.f32.mrb[0].mxu0
        %v520 = vadd.f32 %v299, %v519
        %v521 = vpop.f32.mrb[0].mxu0
        %v522 = vpop.f32.mrb[0].mxu0
        %v523 = vadd.f32 %v299, %v522
        %v524 = vpop.f32.mrb[0].mxu0
        %525 = vmatprep.mubr.bf16.mxu0 %v354
        %526 = vmatmul.mubr.bf16.gmra.mrb[0].mxu0 %v353
        %v527 = vpop.f32.mrb[0].mxu0
        %v528 = vadd.f32 %v299, %v527
        %v529 = vpop.f32.mrb[0].mxu0
        %v530 = vpop.f32.mrb[0].mxu0
        %v531 = vadd.f32 %v299, %v530
        %v532 = vpop.f32.mrb[0].mxu0
        %533 = vmatprep.mubr.bf16.mxu0 %v356
        %534 = vmatmul.mubr.bf16.gmra.mrb[0].mxu0 %v355
        %v535 = vpop.f32.mrb[0].mxu0
        %v536 = vadd.f32 %v299, %v535
        %v537 = vpop.f32.mrb[0].mxu0
        %v538 = vpop.f32.mrb[0].mxu0
        %v539 = vadd.f32 %v299, %v538
        %v540 = vpop.f32.mrb[0].mxu0
        %541 = vmatprep.mubr.bf16.mxu0 %v358
        %542 = vmatmul.mubr.bf16.gmra.mrb[0].mxu0 %v357
        %v543 = vpop.f32.mrb[0].mxu0
        %v544 = vadd.f32 %v299, %v543
        %v545 = vpop.f32.mrb[0].mxu0
        %v546 = vpop.f32.mrb[0].mxu0
        %v547 = vadd.f32 %v299, %v546
        %v548 = vpop.f32.mrb[0].mxu0
        %549 = vmatprep.mubr.bf16.mxu0 %v360
        %550 = vmatmul.mubr.bf16.gmra.mrb[0].mxu0 %v359
        %v551 = vpop.f32.mrb[0].mxu0
        %v552 = vadd.f32 %v299, %v551
        %v553 = vpop.f32.mrb[0].mxu0
        %v554 = vpop.f32.mrb[0].mxu0
        %v555 = vadd.f32 %v299, %v554
        %v556 = vpop.f32.mrb[0].mxu0
        %557 = vmatprep.mubr.bf16.mxu0 %v362
        %558 = vmatmul.mubr.bf16.gmra.mrb[0].mxu0 %v361
        %v559 = vpop.f32.mrb[0].mxu0
        %v560 = vadd.f32 %v299, %v559
        %v561 = vpop.f32.mrb[0].mxu0
        %v562 = vpop.f32.mrb[0].mxu0
        %v563 = vadd.f32 %v299, %v562
        %v564 = vpop.f32.mrb[0].mxu0
        %565 = vmatprep.mubr.bf16.mxu0 %v364
        %566 = vmatmul.mubr.bf16.gmra.mrb[0].mxu0 %v363
        %v567 = vpop.f32.mrb[0].mxu0
        %v568 = vadd.f32 %v299, %v567
        %v569 = vpop.f32.mrb[0].mxu0
        %v570 = vpop.f32.mrb[0].mxu0
        %v571 = vadd.f32 %v299, %v570
        %v572 = vpop.f32.mrb[0].mxu0
        %573 = vdwg.mxu0
        %v574 = vmax.f32 %v512, 0.0
        %v575 = vmax.f32 %v515, 0.0
        %v576 = vmax.f32 %v520, 0.0
        %v577 = vmax.f32 %v523, 0.0
        %v578 = vmax.f32 %v528, 0.0
        %v579 = vmax.f32 %v531, 0.0
        %v580 = vmax.f32 %v536, 0.0
        %v581 = vmax.f32 %v539, 0.0
        %v582 = vmax.f32 %v544, 0.0
        %v583 = vmax.f32 %v547, 0.0
        %v584 = vmax.f32 %v552, 0.0
        %v585 = vmax.f32 %v555, 0.0
        %v586 = vmax.f32 %v560, 0.0
        %v587 = vmax.f32 %v563, 0.0
        %v588 = vmax.f32 %v568, 0.0
        %v589 = vmax.f32 %v571, 0.0
        %vm590 = vcmask 523264
        %591 = vst.msk [vmem:[%s243] sm:$0xff] %vm590, %v574
        %592 = vst.msk [vmem:[%s243 + $0x8] sm:$0xff] %vm590, %v575
        %593 = vst.msk [vmem:[%s243 + $0x10] sm:$0xff] %vm590, %v576
        %594 = vst.msk [vmem:[%s243 + $0x18] sm:$0xff] %vm590, %v577
        %595 = vst.msk [vmem:[%s243 + $0x20] sm:$0xff] %vm590, %v578
        %596 = vst.msk [vmem:[%s243 + $0x28] sm:$0xff] %vm590, %v579
        %597 = vst.msk [vmem:[%s243 + $0x30] sm:$0xff] %vm590, %v580
        %598 = vst.msk [vmem:[%s243 + $0x38] sm:$0xff] %vm590, %v581
        %599 = vst.msk [vmem:[%s243 + $0x40] sm:$0xff] %vm590, %v582
        %600 = vst.msk [vmem:[%s243 + $0x48] sm:$0xff] %vm590, %v583
        %601 = vst.msk [vmem:[%s243 + $0x50] sm:$0xff] %vm590, %v584
        %602 = vst.msk [vmem:[%s243 + $0x58] sm:$0xff] %vm590, %v585
        %603 = vst.msk [vmem:[%s243 + $0x60] sm:$0xff] %vm590, %v586
        %604 = vst.msk [vmem:[%s243 + $0x68] sm:$0xff] %vm590, %v587
        %605 = vst.msk [vmem:[%s243 + $0x70] sm:$0xff] %vm590, %v588
        %606 = vst.msk [vmem:[%s243 + $0x78] sm:$0xff] %vm590, %v589
        %s607 = smul.u32 16, %s21
        %p608 = scmp.lt.s32.totalorder %s607, 63
        %s609 = scalar_select %p608, %s607, 63
        %p610 = scmp.lt.s32.totalorder %s22, 0
        %s611 = scalar_select %p610, %s22, 0
        %s612 = sadd.s32 %s611, %s609
        %s613 = smul.addr %s612, 8
        %s614 = scalar_lea.vmem %s3, %s613
        // Predicated region
        $region37: #{tpu_custom_call.1} parent=31 // pred_check
          %p615 = pneg %p127
        $region38: #{tpu_custom_call.1} parent=31 // pred_check_branch
          %617 = sbr.rel (%p615) target = $region40
        $region39: #{tpu_custom_call.1} parent=31 // pred_region
          %s618 = smul.u32 16, %s21
        $region40: #{tpu_custom_call.1} parent=31 // pred_fallthru
          _
      $region32: #{tpu_custom_call.1} parent=5 // pred_fallthru
        _
      %p619 = scmp.le.s32.totalorder 2, %s12
      // Predicated region
      $region41: #{tpu_custom_call.1} parent=5 // pred_check
        %p620 = pneg %p619
      $region42: #{tpu_custom_call.1} parent=5 // pred_check_branch
        %622 = sbr.rel (%p620) target = $region44
      $region43: #{tpu_custom_call.1} parent=5 // pred_region
        %s623 = ssub.s32 %s12, 2
        // Predicated region
        $region45: #{tpu_custom_call.1} parent=43 // pred_check
          %p624 = pneg %p133
        $region46: #{tpu_custom_call.1} parent=43 // pred_check_branch
          %626 = sbr.rel (%p624) target = $region48
        $region47: #{tpu_custom_call.1} parent=43 // pred_region
          %s627 = smul.u32 16, %s23
          %p628 = scmp.lt.s32.totalorder %s627, 63
          %s629 = scalar_select %p628, %s627, 63
          %p630 = scmp.lt.s32.totalorder %s24, 0
          %s631 = scalar_select %p630, %s24, 0
          %s632 = sadd.s32 %s631, %s629
          %s633 = smul.addr %s632, 8
          %s634 = scalar_lea.vmem %s3, %s633
        $region48: #{tpu_custom_call.1} parent=43 // pred_fallthru
          _
      $region44: #{tpu_custom_call.1} parent=5 // pred_fallthru
        _
    $region6: #{tpu_custom_call.1} parent=1 // loop_footer
      %s16 = sadd.s32 1, %s12
    $region7: #{tpu_custom_call.1} parent=1 // loop_footer_branch
      %11 = sbr.rel target = $region3
    $region8: #{tpu_custom_call.1} parent=1 // loop_exit
      _
    %635 = vsyncpa [#allocation3], 1
    %s636 = scalar_lea.sflag [#allocation3], 1
    %637 = vsyncpa %s636, 1

</llo_original>
